<compile_context>
chip_gen: v5e
topology: v5e:2x2
jax: 0.10.0
libtpu: 0.0.40
codegen_flags: <defaults>
</compile_context>

<pallas_src>
import functools

import jax
import jax.numpy as jnp
from jax.experimental import pallas as pl
from jax.experimental.pallas import tpu as pltpu


def _label_smoothing_kernel(target_ref, pred_ref, loss_ref, *, confidence,
                            off_value, n_valid, tb):
    """One batch tile: (tb, C) pred + (tb, 1) target -> (8, 1) partial sum."""
    i = pl.program_id(0)

    p = pred_ref[...].astype(jnp.float32)                  # (tb, C) f32
    tgt = target_ref[...]                                  # (tb, 1) int32
    C = p.shape[-1]

    # Reductions taken directly from p (no materialized `shifted` tile, no
    # (tb, C) int32 iota): only exp(p - m) depends on the row max, so max /
    # sum / target-gather can overlap and fewer wide intermediates stay live.
    m = jnp.max(p, axis=-1, keepdims=True)                           # (tb, 1)
    sum_p = jnp.sum(p, axis=-1, keepdims=True)                       # (tb, 1)
    col = jax.lax.broadcasted_iota(jnp.int32, (1, C), 1)             # (1, C)
    p_at_tgt = jnp.sum(jnp.where(col == tgt, p, 0.0),
                       axis=-1, keepdims=True)                       # (tb, 1)
    lse = jnp.log(jnp.sum(jnp.exp(p - m), axis=-1, keepdims=True))   # (tb, 1)

    # log_softmax(p)[c] = (p[c] - m) - lse; with true_dist = off everywhere
    # and conf at the target:
    #   loss_row = -( off*(sum_c(p-m) - C*lse) + (conf-off)*((p[tgt]-m) - lse) )
    sum_shifted = sum_p - C * m
    shifted_at_tgt = p_at_tgt - m
    row_loss = -(off_value * (sum_shifted - C * lse)
                 + (confidence - off_value) * (shifted_at_tgt - lse))  # (tb,1)

    # Zero padded rows so the external sum / N is exact.
    row_id = i * tb + jax.lax.broadcasted_iota(jnp.int32, (tb, 1), 0)
    masked = jnp.where(row_id < n_valid, row_loss, 0.0)

    # Per-tile partial sum. A sublane-aligned (8, 1) block (value in sublane 0,
    # zeros elsewhere) avoids per-row masked single-lane stores entirely.
    part = jnp.sum(masked)                                           # scalar
    sub_id = jax.lax.broadcasted_iota(jnp.int32, (8, 1), 0)
    loss_ref[...] = jnp.where(sub_id == 0, part, 0.0)


def _round_up(x, m):
    return ((x + m - 1) // m) * m


def _tpu_info():
    try:
        return pltpu.get_tpu_info()
    except Exception:
        return None


def _is_v7x(info):
    if info is None:
        return False
    try:
        for attr in ("chip_version", "version", "name"):
            v = getattr(info, attr, None)
            if v is not None and "7" in str(v):
                return True
    except Exception:
        pass
    return False


def _per_core_vmem_bytes(info):
    """Best-effort per-TensorCore VMEM; conservative fallback (64 MiB)."""
    fallback = 64 * 1024 * 1024
    if info is None:
        return fallback
    try:
        vmem = int(info.vmem_capacity_bytes)
    except Exception:
        return fallback
    if vmem <= 0:
        return fallback
    # v7x has 64 MiB per TensorCore (2 TCs/chip); clamp if a per-chip number
    # was reported so budgets stay per-core.
    if _is_v7x(info):
        vmem = min(vmem, 64 * 1024 * 1024)
    return vmem


def _select_tb(n, c, pred_dtype, tile_budget_bytes, pred_buffers):
    in_bytes = jnp.dtype(pred_dtype).itemsize
    sub = 8 if in_bytes >= 4 else (16 if in_bytes == 2 else 32)
    c_eff = max(_round_up(c, 128), 128)          # VMEM lane padding
    # Per-row VMEM estimate (every (tb, x) tile lane-pads to a multiple of 128):
    #   * pred input tile, pred_buffers-deep pipeline
    #   * ~3 live (tb, C) f32 intermediates (upcast p, exp(p-m), target select)
    #   * lane-padded (tb, 1) int32 target input, double-buffered
    #   * ~6 live (tb, 1) f32/int32 column intermediates (m, sums, lse, mask, ...)
    per_row = (pred_buffers * c_eff * in_bytes
               + 3 * c_eff * 4
               + 2 * 128 * 4
               + 6 * 128 * 4)
    tb = tile_budget_bytes // per_row
    tb = min(tb, _round_up(n, sub))              # no artificial 1024-row cap
    tb = max(sub, (tb // sub) * sub)
    return tb, sub


def label_smoothing_loss(pred, target, *, classes, smoothing=0.1, tb=None,
                         pred_buffers=None):
    """pred: (N, C) float (f32 or bf16), target: (N,) int. Returns scalar f32."""
    assert pred.ndim == 2
    N, C = pred.shape
    assert C == classes
    confidence = 1.0 - smoothing
    off_value = smoothing / (classes - 1)

    info = _tpu_info()
    per_core_vmem = _per_core_vmem_bytes(info)
    # ~45% of per-core VMEM for pipeline buffers + intermediates:
    #   v7x (64 MiB/TC) -> ~29 MiB; v5e/v6e (128 MiB) -> ~58 MiB.
    tile_budget = max(8 << 20, int(per_core_vmem * 0.45))

    if pred_buffers is None:
        # v7x: smaller tiles + higher per-TC HBM BW -> a 3rd pred buffer hides
        # the exposed DMA tail. 2 buffers elsewhere.
        pred_buffers = 3 if _is_v7x(info) else 2

    if tb is None:
        tb, _ = _select_tb(N, C, pred.dtype, tile_budget, pred_buffers)
    else:
        sub = 8 if jnp.dtype(pred.dtype).itemsize >= 4 else 16
        assert tb % sub == 0, "tb must be sublane-aligned for the pred dtype"

    n_pad = _round_up(N, tb)
    if n_pad != N:
        pred = jnp.pad(pred, ((0, n_pad - N), (0, 0)))
        target = jnp.pad(target, (0, n_pad - N))
    target2d = target.astype(jnp.int32).reshape(n_pad, 1)
    grid = n_pad // tb

    kernel = functools.partial(
        _label_smoothing_kernel,
        confidence=confidence, off_value=off_value, n_valid=N, tb=tb)

    if pred_buffers != 2:
        pred_spec = pl.BlockSpec((tb, C), lambda i: (i, 0),
                                 pipeline_mode=pl.Buffered(pred_buffers))
    else:
        pred_spec = pl.BlockSpec((tb, C), lambda i: (i, 0))

    per_tile = pl.pallas_call(
        kernel,
        out_shape=jax.ShapeDtypeStruct((grid * 8, 1), jnp.float32),
        grid_spec=pltpu.PrefetchScalarGridSpec(
            num_scalar_prefetch=0,
            grid=(grid,),
            in_specs=[
                pl.BlockSpec((tb, 1), lambda i: (i, 0)),   # target
                pred_spec,                                  # pred
            ],
            out_specs=pl.BlockSpec((8, 1), lambda i: (i, 0)),
        ),
        compiler_params=pltpu.CompilerParams(
            dimension_semantics=("parallel",),
            vmem_limit_bytes=min(int(per_core_vmem * 0.75),
                                 tile_budget + (16 << 20)),
        ),
    )(target2d, pred)

    # Mean over the true batch (padded rows / unused sublanes were zeroed
    # in-kernel, so a plain sum over the tiny per-tile output is exact).
    return jnp.sum(per_tile) / jnp.float32(N)


def _reference_loss(pred, target, classes, smoothing):
    p = pred.astype(jnp.float32)
    logp = jax.nn.log_softmax(p, axis=-1)
    n, c = p.shape
    true_dist = jnp.full((n, c), smoothing / (classes - 1), dtype=jnp.float32)
    true_dist = true_dist.at[jnp.arange(n), target].set(1.0 - smoothing)
    return jnp.mean(jnp.sum(-true_dist * logp, axis=-1))


if __name__ == "__main__":
    key = jax.random.PRNGKey(0)
    k1, k2, k3, k4 = jax.random.split(key, 4)
    smoothing = 0.1

    # Case 1: f32 pred, tile-aligned batch (batch=8, classes=32).
    N, C = 8, 32
    pred = jax.random.normal(k1, (N, C), dtype=jnp.float32)
    target = jax.random.randint(k2, (N,), 0, C, dtype=jnp.int32)
    loss = jax.block_until_ready(
        label_smoothing_loss(pred, target, classes=C, smoothing=smoothing))
    ref = _reference_loss(pred, target, C, smoothing)
    assert jnp.allclose(loss, ref, rtol=1e-5, atol=1e-5), (loss, ref)

    # Case 2: bf16 pred (halves HBM traffic) + ragged batch (exercises
    # padding + in-kernel row masking).
    N2, C2 = 10, 32
    pred2 = jax.random.normal(k3, (N2, C2), dtype=jnp.float32).astype(jnp.bfloat16)
    target2 = jax.random.randint(k4, (N2,), 0, C2, dtype=jnp.int32)
    loss2 = jax.block_until_ready(
        label_smoothing_loss(pred2, target2, classes=C2, smoothing=smoothing))
    ref2 = _reference_loss(pred2, target2, C2, smoothing)
    assert jnp.allclose(loss2, ref2, rtol=1e-3, atol=1e-3), (loss2, ref2)

    print("KERNEL_OK")
</pallas_src>

<mosaic_0001>
module attributes {stable_mosaic.version = 11 : i64} {
  func.func @_label_smoothing_kernel(%arg0: i32, %arg1: memref<8x1xi32, #tpu.memory_space<vmem>>, %arg2: memref<8x32xf32, #tpu.memory_space<vmem>>, %arg3: memref<8x1xf32, #tpu.memory_space<vmem>>) attributes {dimension_semantics = [#tpu.dimension_semantics<parallel>], iteration_bounds = array<i64: 1>, scalar_prefetch = 0 : i64, scratch_operands = 0 : i64, tpu.core_type = #tpu.core_type<tc>, window_params = [{transform_indices = @transform_0, window_bounds = array<i64: 8, 1>}, {transform_indices = @transform_1, window_bounds = array<i64: 8, 32>}, {transform_indices = @transform_2, window_bounds = array<i64: 8, 1>}]} {
    %c0 = arith.constant 0 : index
    %c0_0 = arith.constant 0 : index
    %0 = vector.load %arg2[%c0, %c0_0] : memref<8x32xf32, #tpu.memory_space<vmem>>, vector<8x32xf32>
    %c0_1 = arith.constant 0 : index
    %c0_2 = arith.constant 0 : index
    %1 = vector.load %arg1[%c0_1, %c0_2] : memref<8x1xi32, #tpu.memory_space<vmem>>, vector<8x1xi32>
    %cst = arith.constant dense<0xFF800000> : vector<8xf32>
    %2 = vector.multi_reduction <maximumf>, %0, %cst [1] : vector<8x32xf32> to vector<8xf32>
    %3 = vector.shape_cast %2 : vector<8xf32> to vector<8x1xf32>
    %cst_3 = arith.constant dense<0.000000e+00> : vector<8xf32>
    %4 = vector.multi_reduction <add>, %0, %cst_3 [1] : vector<8x32xf32> to vector<8xf32>
    %5 = vector.shape_cast %4 : vector<8xf32> to vector<8x1xf32>
    %6 = tpu.iota {dimensions = array<i32: 1>} : vector<1x32xi32>
    %7 = vector.broadcast %6 : vector<1x32xi32> to vector<8x32xi32>
    %8 = vector.broadcast %1 : vector<8x1xi32> to vector<8x32xi32>
    %9 = arith.cmpi eq, %7, %8 : vector<8x32xi32>
    %cst_4 = arith.constant 0.000000e+00 : f32
    %10 = vector.broadcast %cst_4 : f32 to vector<8x32xf32>
    %11 = arith.select %9, %0, %10 : vector<8x32xi1>, vector<8x32xf32>
    %cst_5 = arith.constant dense<0.000000e+00> : vector<8xf32>
    %12 = vector.multi_reduction <add>, %11, %cst_5 [1] : vector<8x32xf32> to vector<8xf32>
    %13 = vector.shape_cast %12 : vector<8xf32> to vector<8x1xf32>
    %14 = vector.broadcast %3 : vector<8x1xf32> to vector<8x32xf32>
    %15 = arith.subf %0, %14 : vector<8x32xf32>
    %16 = math.exp %15 : vector<8x32xf32>
    %cst_6 = arith.constant dense<0.000000e+00> : vector<8xf32>
    %17 = vector.multi_reduction <add>, %16, %cst_6 [1] : vector<8x32xf32> to vector<8xf32>
    %18 = vector.shape_cast %17 : vector<8xf32> to vector<8x1xf32>
    %19 = math.log %18 : vector<8x1xf32>
    %cst_7 = arith.constant 3.200000e+01 : f32
    %20 = vector.broadcast %cst_7 : f32 to vector<8x1xf32>
    %21 = arith.mulf %20, %3 : vector<8x1xf32>
    %22 = arith.subf %5, %21 : vector<8x1xf32>
    %23 = arith.subf %13, %3 : vector<8x1xf32>
    %cst_8 = arith.constant 3.200000e+01 : f32
    %24 = vector.broadcast %cst_8 : f32 to vector<8x1xf32>
    %25 = arith.mulf %24, %19 : vector<8x1xf32>
    %26 = arith.subf %22, %25 : vector<8x1xf32>
    %cst_9 = arith.constant 0.0032258064 : f32
    %27 = vector.broadcast %cst_9 : f32 to vector<8x1xf32>
    %28 = arith.mulf %27, %26 : vector<8x1xf32>
    %29 = arith.subf %23, %19 : vector<8x1xf32>
    %cst_10 = arith.constant 0.896774172 : f32
    %30 = vector.broadcast %cst_10 : f32 to vector<8x1xf32>
    %31 = arith.mulf %30, %29 : vector<8x1xf32>
    %32 = arith.addf %28, %31 : vector<8x1xf32>
    %cst_11 = arith.constant 0.000000e+00 : f32
    %33 = vector.broadcast %cst_11 : f32 to vector<8x1xf32>
    %34 = arith.subf %33, %32 : vector<8x1xf32>
    %c8_i32 = arith.constant 8 : i32
    %35 = arith.muli %arg0, %c8_i32 : i32
    %36 = tpu.iota {dimensions = array<i32: 0>} : vector<8x1xi32>
    %37 = vector.broadcast %35 : i32 to vector<8x1xi32>
    %38 = arith.addi %37, %36 : vector<8x1xi32>
    %c8_i32_12 = arith.constant 8 : i32
    %39 = vector.broadcast %c8_i32_12 : i32 to vector<8x1xi32>
    %40 = arith.cmpi slt, %38, %39 : vector<8x1xi32>
    %cst_13 = arith.constant 0.000000e+00 : f32
    %41 = vector.broadcast %cst_13 : f32 to vector<8x1xf32>
    %42 = arith.select %40, %34, %41 : vector<8x1xi1>, vector<8x1xf32>
    %43 = vector.shape_cast %42 : vector<8x1xf32> to vector<1x8x1xf32>
    %cst_14 = arith.constant dense<0.000000e+00> : vector<1xf32>
    %44 = vector.multi_reduction <add>, %43, %cst_14 [1, 2] : vector<1x8x1xf32> to vector<1xf32>
    %45 = vector.shape_cast %44 : vector<1xf32> to vector<1x1x1xf32>
    %46 = vector.extract %45[0, 0, 0] : f32 from vector<1x1x1xf32>
    %47 = tpu.iota {dimensions = array<i32: 0>} : vector<8x1xi32>
    %c0_i32 = arith.constant 0 : i32
    %48 = vector.broadcast %c0_i32 : i32 to vector<8x1xi32>
    %49 = arith.cmpi eq, %47, %48 : vector<8x1xi32>
    %cst_15 = arith.constant 0.000000e+00 : f32
    %50 = vector.broadcast %46 : f32 to vector<8x1xf32>
    %51 = vector.broadcast %cst_15 : f32 to vector<8x1xf32>
    %52 = arith.select %49, %50, %51 : vector<8x1xi1>, vector<8x1xf32>
    %c0_16 = arith.constant 0 : index
    %c0_17 = arith.constant 0 : index
    %53 = vector.load %arg3[%c0_16, %c0_17] : memref<8x1xf32, #tpu.memory_space<vmem>>, vector<8x1xf32>
    tpu.vector_store %arg3[%c0_16, %c0_17], %52 {strides = array<i32>} : memref<8x1xf32, #tpu.memory_space<vmem>>, vector<8x1xf32>,
    return
  }
  func.func @transform_0(%arg0: i32) -> (i32, i32) {
    %c0_i32 = arith.constant 0 : i32
    %c0_i32_0 = arith.constant 0 : i32
    return %arg0, %c0_i32 : i32, i32
  }
  func.func @transform_1(%arg0: i32) -> (i32, i32) {
    %c0_i32 = arith.constant 0 : i32
    %c0_i32_0 = arith.constant 0 : i32
    return %arg0, %c0_i32 : i32, i32
  }
  func.func @transform_2(%arg0: i32) -> (i32, i32) {
    %c0_i32 = arith.constant 0 : i32
    %c0_i32_0 = arith.constant 0 : i32
    return %arg0, %c0_i32 : i32, i32
  }
}

</mosaic_0001>

<llo_original>
// kernel: tpu_custom_call.1
$region0: #{tpu_custom_call.1}
  #allocation0 [shape = 'u32[]', space=smem, size = 0x4, offset = 0x4, fixed_abs, tag = 'smem constant byte address 0x4 - core index']
  #allocation1 [shape = 'u32[72,128]{1,0:T(1,128)}', space=vmem, size = 0x9000, scoped, tag = 'internal scratch']
  %s0 = inlined_call_operand.vmem [shape: s32[8,1], index: 0, kind: input, shape index: {}]
  %s1 = inlined_call_operand.vmem [shape: f32[8,32], index: 1, kind: input, shape index: {}]
  %s2 = inlined_call_operand.vmem [shape: f32[8,1], index: 2, kind: output, shape index: {}]
  %s3 = sld [smem:[#allocation0]]
  $region18: #{tpu_custom_call.1} parent=0
    _
  %s5 = ssub.s32 1, %s3
  %s6 = scalar_select 0, %s5, %s3
  // Predicated region
  $region2: #{tpu_custom_call.1} parent=0 // pred_check
    _
  $region3: #{tpu_custom_call.1} parent=0 // pred_check_branch
    %8 = sbr.rel (0) target = $region5
  $region4: #{tpu_custom_call.1} parent=0 // pred_region
    _
  $region5: #{tpu_custom_call.1} parent=0 // pred_fallthru
    _
  // Predicated region
  $region6: #{tpu_custom_call.1} parent=0 // pred_check
    _
  $region7: #{tpu_custom_call.1} parent=0 // pred_check_branch
    %10 = sbr.rel (0) target = $region9
  $region8: #{tpu_custom_call.1} parent=0 // pred_region
    _
  $region9: #{tpu_custom_call.1} parent=0 // pred_fallthru
    _
  %v11 = vld [vmem:[%s1] sm:$0xff]
  %v12 = vld [vmem:[%s0] sm:$0xff]
  %vm13 = vcmask 261120
  %v14 = vsel %vm13, %v11, -inf
  %15 = vmax.xlane.f32.xlu0 %v14
  %v16 = vpop.xlane.xlu0 %15
  %v17 = vsel %vm13, %v11, 0.0
  %18 = vadd.xlane.f32.xlu0 %v17
  %v19 = vpop.xlane.xlu0 %18
  %v20 = vlaneseq
  %v21 = vand.u32 %v20, 127
  %22 = vset.pattern.permute.xlu0 0
  %23 = vperm.xlu0 %22, %v12
  %v24 = vpop.permute.xlu0 %23
  %vm25 = vcmp.eq.s32.totalorder %v21, %v24
  %v26 = vsel %vm25, %v11, 0.0
  %v27 = vsel %vm13, %v26, 0.0
  %28 = vadd.xlane.f32.xlu0 %v27
  %v29 = vpop.xlane.xlu0 %28
  %v30 = vsub.f32 %v11, %v16
  %v31 = vmul.f32 %v30, 1.442695
  %v32 = vpow.pop %v31
  %v33 = vsel %vm13, %v32, 0.0
  %34 = vadd.xlane.f32.xlu0 %v33
  %v35 = vpop.xlane.xlu0 %34
  %v36 = vlog2.pop %v35
  %v37 = vmul.f32 %v36, 0.6931472
  %v38 = vmul.f32 %v16, 32.0
  %v39 = vsub.f32 %v19, %v38
  %v40 = vsub.f32 %v29, %v16
  %v41 = vmul.f32 %v37, 32.0
  %v42 = vsub.f32 %v39, %v41
  %v43 = vmul.f32 %v42, 0.0032258064
  %v44 = vsub.f32 %v40, %v37
  %v45 = vmul.f32 %v44, 0.8967742
  %v46 = vadd.f32 %v43, %v45
  %v47 = vsub.f32 0.0, %v46
  %s48 = smul.u32 0, 8
  %v49 = vlaneseq
  %v50 = vshrl.u32 %v49, 7
  %v51 = vstv %s48
  %v52 = vadd.s32 %v51, %v50
  %vm53 = vcmp.lt.s32.totalorder %v52, 8
  %v54 = vsel %vm53, %v47, 0.0
  %vm55 = vcmask 7168
  %v56 = vsel %vm55, %v54, 0.0
  %57 = vadd.xlane.f32.xlu0 %v56
  %v58 = vpop.xlane.xlu0 %57
  %v59 = vrot.slane %v58, 4
  %v60 = vadd.f32 %v58, %v59
  %v61 = vrot.slane %v60, 2
  %v62 = vadd.f32 %v60, %v61
  %v63 = vrot.slane %v62, 1
  %v64 = vadd.f32 %v62, %v63
  %s65 = vtos %v64
  %vm66 = vcmp.eq.s32.totalorder %v50, 0
  %v67 = vstv %s65
  %v68 = vsel %vm66, %v67, 0.0
  %69 = vst.msk [vmem:[%s2] sm:$0xff] %vm55, %v68
  // Predicated region
  $region10: #{tpu_custom_call.1} parent=0 // pred_check
    _
  $region11: #{tpu_custom_call.1} parent=0 // pred_check_branch
    %71 = sbr.rel (0) target = $region13
  $region12: #{tpu_custom_call.1} parent=0 // pred_region
    _
  $region13: #{tpu_custom_call.1} parent=0 // pred_fallthru
    _
  // Predicated region
  $region14: #{tpu_custom_call.1} parent=0 // pred_check
    _
  $region15: #{tpu_custom_call.1} parent=0 // pred_check_branch
    %73 = sbr.rel (0) target = $region17
  $region16: #{tpu_custom_call.1} parent=0 // pred_region
    _
  $region17: #{tpu_custom_call.1} parent=0 // pred_fallthru
    _

</llo_original>
